<compile_context>
chip_gen: v7x
topology: tpu7x:2x2x1
jax: 0.10.0
libtpu: 0.0.40
codegen_flags: <defaults>
</compile_context>

<pallas_src>
import jax
import jax.numpy as jnp
from jax.experimental import pallas as pl
from jax.experimental.pallas import tpu as pltpu

NUM_VIEWS = 4
MARGIN = 0.3
EPS_NORM = 1e-12
EPS_DIST = 1e-12


def _make_kernel(tr: int, num_rows: int):
    """Kernel for one (tr, D) row tile; writes one per-tile partial-loss block."""
    assert tr % 8 == 0 and tr % NUM_VIEWS == 0  # groups never straddle tiles

    def kernel(x_ref, out_ref):
        tile = pl.program_id(0)
        x = x_ref[...].astype(jnp.float32)                       # (tr, D)

        # F.normalize(dim=1, eps=1e-12): xn = x * rsqrt(max(||x||^2, eps^2)).
        sq = jnp.sum(x * x, axis=1, keepdims=True)               # (tr, 1)
        inv = jax.lax.rsqrt(jnp.maximum(sq, EPS_NORM * EPS_NORM))
        xn = x * inv                                             # normalized rows
        nsq = sq * inv * inv                                     # ||xn_i||^2 (1, or 0 for zero rows)

        row_idx = jax.lax.broadcasted_iota(jnp.int32, (tr, 1), 0)
        local = row_idx % NUM_VIEWS                              # index within 4-row group

        def group_roll(v, k):
            # v[i] -> v[group_start(i) + (local_i + k) % NUM_VIEWS]
            # i.e. the partner row at offset +k inside the same 4-view group.
            # pltpu.roll follows jnp.roll semantics: out[i] = v[(i - shift) % tr].
            fwd = pltpu.roll(v, shift=tr - k, axis=0)            # v[(i + k) % tr]
            bwd = pltpu.roll(v, shift=NUM_VIEWS - k, axis=0)     # v[i + k - 4]
            return jnp.where(local + k < NUM_VIEWS, fwd, bwd)

        # Only the 3 within-group off-diagonal distances matter per row, so compute
        # them directly (sublane roll + multiply + lane reduce); no Gram, no MXU.
        max_d2 = jnp.full((tr, 1), -jnp.inf, dtype=jnp.float32)
        for k in (1, 2, 3):
            xk = group_roll(xn, k)                               # (tr, D) partner rows
            dot_k = jnp.sum(xn * xk, axis=1, keepdims=True)      # <xn_i, xn_j>
            nsq_k = jnp.sum(xk * xk, axis=1, keepdims=True)      # ||xn_j||^2
            max_d2 = jnp.maximum(max_d2, nsq + nsq_k - 2.0 * dot_k)

        # clamp(1e-12).sqrt() only on the (tr,1) per-row maxima (monotone ops commute
        # with max), instead of sqrt-ing a full (tr,tr) matrix.
        max_dist = jnp.sqrt(jnp.maximum(max_d2, EPS_DIST))

        # MarginRankingLoss(margin=0.3, x1=0, x2=max_dist, y=1) -> relu(max_dist+0.3);
        # sum over rows / 4 == sum over 4-row chunks of per-chunk means.
        per_row = jnp.maximum(max_dist + MARGIN, 0.0)

        # Mask zero-padded tail rows (padding is always whole 4-row groups).
        valid = (tile * tr + row_idx) < num_rows
        per_row = jnp.where(valid, per_row, 0.0)

        partial = jnp.sum(per_row) * (1.0 / NUM_VIEWS)
        out_ref[...] = jnp.broadcast_to(partial, out_ref.shape).astype(jnp.float32)

    return kernel


def decoupling_shared_shared_loss(shared_features, *, max_rows_per_tile: int = 1024):
    """Row-tiled, pipelined Pallas implementation. Returns a scalar f32 loss."""
    B, D = shared_features.shape
    num_rows = (B // NUM_VIEWS) * NUM_VIEWS      # ragged tail rows dropped (as in PyTorch)
    if num_rows == 0:
        return jnp.float32(0.0)
    x = shared_features[:num_rows]

    itemsize = jnp.dtype(shared_features.dtype).itemsize
    # ~2 MiB streamed input tile (4 MiB double-buffered): near the HBM roofline on
    # v5e/v6e and comfortably inside v7x's smaller (64 MiB) VMEM. With the Gram gone
    # the per-tile working set is linear in tr, so this is purely a DMA-size knob.
    cap = max(8, ((2 * 1024 * 1024) // max(D * itemsize, 1)) // 8 * 8)
    tr = max(8, (min(int(max_rows_per_tile), cap) // 8) * 8)
    if num_rows <= tr:
        if num_rows >= 128:
            # Enough work: use >=2 tiles so the "parallel" axis feeds both v7x TCs.
            tr = max(8, ((num_rows + 15) // 16) * 8)
        else:
            tr = ((num_rows + 7) // 8) * 8       # single small tile
    assert tr % 8 == 0 and tr % NUM_VIEWS == 0
    padded = ((num_rows + tr - 1) // tr) * tr
    if padded != num_rows:
        x = jnp.pad(x, ((0, padded - num_rows), (0, 0)))
    num_tiles = padded // tr

    cost = pl.CostEstimate(
        flops=16 * padded * D,                   # 3 partner dot/norm passes + normalize
        transcendentals=2 * padded,              # rsqrt + sqrt per row
        bytes_accessed=padded * D * itemsize + num_tiles * 128 * 4)

    partials = pl.pallas_call(
        _make_kernel(tr, num_rows),
        out_shape=jax.ShapeDtypeStruct((num_tiles, 1, 128), jnp.float32),
        grid=(num_tiles,),
        in_specs=[pl.BlockSpec((tr, D), lambda i: (i, 0))],
        out_specs=pl.BlockSpec((1, 1, 128), lambda i: (i, 0, 0)),
        compiler_params=pltpu.CompilerParams(
            dimension_semantics=("parallel",),
            vmem_limit_bytes=32 * 1024 * 1024),
        cost_estimate=cost,
    )(x)

    # Per-tile partials (replicated across the 128-lane block) -> scalar sum.
    return jnp.sum(partials[:, 0, 0])


def _reference(shared_features):
    """Pure-JAX reference mirroring the PyTorch module."""
    B, _ = shared_features.shape
    num_chunks = B // NUM_VIEWS
    total = jnp.float32(0.0)
    for c in range(num_chunks):
        xc = shared_features[c * NUM_VIEWS:(c + 1) * NUM_VIEWS].astype(jnp.float32)
        norm = jnp.sqrt(jnp.sum(xc * xc, axis=1, keepdims=True))
        xn = xc / jnp.maximum(norm, EPS_NORM)
        sq = jnp.sum(xn * xn, axis=1, keepdims=True)
        gram = jnp.matmul(xn, xn.T, precision=jax.lax.Precision.HIGHEST)
        d2 = sq + sq.T - 2.0 * gram
        dist = jnp.sqrt(jnp.maximum(d2, EPS_DIST))
        mask = ~jnp.eye(NUM_VIEWS, dtype=bool)
        md = jnp.max(jnp.where(mask, dist, -jnp.inf), axis=1)
        total = total + jnp.mean(jnp.maximum(md + MARGIN, 0.0))
    return total


def _check(a, b):
    a, b = float(a), float(b)
    assert abs(a - b) <= 1e-4 + 1e-4 * abs(b), (a, b)


if __name__ == "__main__":
    # Primary case: batch=8 (=> 2 view-groups of 4), hidden=32
    x1 = jax.random.normal(jax.random.PRNGKey(0), (8, 32), dtype=jnp.float32)
    loss1 = decoupling_shared_shared_loss(x1)
    jax.block_until_ready(loss1)
    _check(loss1, _reference(x1))

    # Ragged batch: tail rows beyond B//4*4 are dropped, as in the PyTorch loop.
    x2 = jax.random.normal(jax.random.PRNGKey(1), (10, 64), dtype=jnp.float32)
    loss2 = decoupling_shared_shared_loss(x2)
    jax.block_until_ready(loss2)
    _check(loss2, _reference(x2))

    # Multi-tile path: 40 rows with 16-row tiles -> 3 tiles, zero-padded final tile.
    x3 = jax.random.normal(jax.random.PRNGKey(2), (40, 128), dtype=jnp.float32)
    loss3 = decoupling_shared_shared_loss(x3, max_rows_per_tile=16)
    jax.block_until_ready(loss3)
    _check(loss3, _reference(x3))

    # Two-tile "megacore" path: 160 rows -> 2 tiles of 80 rows under default settings.
    x4 = jax.random.normal(jax.random.PRNGKey(3), (160, 192), dtype=jnp.float32)
    loss4 = decoupling_shared_shared_loss(x4)
    jax.block_until_ready(loss4)
    _check(loss4, _reference(x4))

    print("KERNEL_OK")
</pallas_src>

<mosaic_0001>
module attributes {stable_mosaic.version = 11 : i64} {
  func.func @kernel(%arg0: i32, %arg1: memref<8x32xf32, #tpu.memory_space<vmem>>, %arg2: memref<1x1x128xf32, #tpu.memory_space<vmem>>) attributes {dimension_semantics = [#tpu.dimension_semantics<parallel>], iteration_bounds = array<i64: 1>, scalar_prefetch = 0 : i64, scratch_operands = 0 : i64, tpu.core_type = #tpu.core_type<tc>, window_params = [{transform_indices = @transform_0, window_bounds = array<i64: 8, 32>}, {transform_indices = @transform_1, window_bounds = array<i64: 1, 1, 128>}]} {
    %c0 = arith.constant 0 : index
    %c0_0 = arith.constant 0 : index
    %0 = vector.load %arg1[%c0, %c0_0] : memref<8x32xf32, #tpu.memory_space<vmem>>, vector<8x32xf32>
    %1 = arith.mulf %0, %0 : vector<8x32xf32>
    %cst = arith.constant dense<0.000000e+00> : vector<8xf32>
    %2 = vector.multi_reduction <add>, %1, %cst [1] : vector<8x32xf32> to vector<8xf32>
    %3 = vector.shape_cast %2 : vector<8xf32> to vector<8x1xf32>
    %cst_1 = arith.constant 1.000000e-24 : f32
    %4 = vector.broadcast %cst_1 : f32 to vector<8x1xf32>
    %5 = arith.maximumf %3, %4 : vector<8x1xf32>
    %6 = math.rsqrt %5 : vector<8x1xf32>
    %7 = vector.broadcast %6 : vector<8x1xf32> to vector<8x32xf32>
    %8 = arith.mulf %0, %7 : vector<8x32xf32>
    %9 = arith.mulf %3, %6 : vector<8x1xf32>
    %10 = arith.mulf %9, %6 : vector<8x1xf32>
    %11 = tpu.iota {dimensions = array<i32: 0>} : vector<8x1xi32>
    %c4_i32 = arith.constant 4 : i32
    %c0_i32 = arith.constant 0 : i32
    %12 = arith.cmpi eq, %c4_i32, %c0_i32 : i32
    %c1_i32 = arith.constant 1 : i32
    %13 = arith.select %12, %c1_i32, %c4_i32 : i32
    %14 = vector.broadcast %13 : i32 to vector<8x1xi32>
    %15 = arith.remsi %11, %14 : vector<8x1xi32>
    %c0_i32_2 = arith.constant 0 : i32
    %16 = vector.broadcast %c0_i32_2 : i32 to vector<8x1xi32>
    %17 = arith.cmpi ne, %15, %16 : vector<8x1xi32>
    %c0_i32_3 = arith.constant 0 : i32
    %18 = vector.broadcast %c0_i32_3 : i32 to vector<8x1xi32>
    %19 = arith.cmpi slt, %15, %18 : vector<8x1xi32>
    %c0_i32_4 = arith.constant 0 : i32
    %20 = arith.cmpi slt, %13, %c0_i32_4 : i32
    %21 = vector.broadcast %20 : i1 to vector<8x1xi1>
    %22 = vector.broadcast %21 : vector<8x1xi1> to vector<8x1xi1>
    %23 = arith.xori %19, %22 : vector<8x1xi1>
    %24 = arith.andi %23, %17 : vector<8x1xi1>
    %25 = vector.broadcast %13 : i32 to vector<8x1xi32>
    %26 = arith.addi %15, %25 : vector<8x1xi32>
    %27 = arith.select %24, %26, %15 : vector<8x1xi1>, vector<8x1xi32>
    %cst_5 = arith.constant 0xFF800000 : f32
    %28 = vector.broadcast %cst_5 : f32 to vector<8x1xf32>
    %c7_i32 = arith.constant 7 : i32
    %29 = tpu.dynamic_rotate %8 by %c7_i32 dim 0 : vector<8x32xf32>, i32 -> vector<8x32xf32>
    %c3_i32 = arith.constant 3 : i32
    %30 = tpu.dynamic_rotate %8 by %c3_i32 dim 0 : vector<8x32xf32>, i32 -> vector<8x32xf32>
    %c1_i32_6 = arith.constant 1 : i32
    %31 = vector.broadcast %c1_i32_6 : i32 to vector<8x1xi32>
    %32 = arith.addi %27, %31 : vector<8x1xi32>
    %c4_i32_7 = arith.constant 4 : i32
    %33 = vector.broadcast %c4_i32_7 : i32 to vector<8x1xi32>
    %34 = arith.cmpi slt, %32, %33 : vector<8x1xi32>
    %35 = vector.shape_cast %34 : vector<8x1xi1> to vector<8x1xi1>
    %36 = vector.broadcast %35 : vector<8x1xi1> to vector<8x32xi1>
    %37 = arith.select %36, %29, %30 : vector<8x32xi1>, vector<8x32xf32>
    %38 = arith.mulf %8, %37 : vector<8x32xf32>
    %cst_8 = arith.constant dense<0.000000e+00> : vector<8xf32>
    %39 = vector.multi_reduction <add>, %38, %cst_8 [1] : vector<8x32xf32> to vector<8xf32>
    %40 = vector.shape_cast %39 : vector<8xf32> to vector<8x1xf32>
    %41 = arith.mulf %37, %37 : vector<8x32xf32>
    %cst_9 = arith.constant dense<0.000000e+00> : vector<8xf32>
    %42 = vector.multi_reduction <add>, %41, %cst_9 [1] : vector<8x32xf32> to vector<8xf32>
    %43 = vector.shape_cast %42 : vector<8xf32> to vector<8x1xf32>
    %44 = arith.addf %10, %43 : vector<8x1xf32>
    %cst_10 = arith.constant 2.000000e+00 : f32
    %45 = vector.broadcast %cst_10 : f32 to vector<8x1xf32>
    %46 = arith.mulf %45, %40 : vector<8x1xf32>
    %47 = arith.subf %44, %46 : vector<8x1xf32>
    %48 = arith.maximumf %28, %47 : vector<8x1xf32>
    %c6_i32 = arith.constant 6 : i32
    %49 = tpu.dynamic_rotate %8 by %c6_i32 dim 0 : vector<8x32xf32>, i32 -> vector<8x32xf32>
    %c2_i32 = arith.constant 2 : i32
    %50 = tpu.dynamic_rotate %8 by %c2_i32 dim 0 : vector<8x32xf32>, i32 -> vector<8x32xf32>
    %c2_i32_11 = arith.constant 2 : i32
    %51 = vector.broadcast %c2_i32_11 : i32 to vector<8x1xi32>
    %52 = arith.addi %27, %51 : vector<8x1xi32>
    %c4_i32_12 = arith.constant 4 : i32
    %53 = vector.broadcast %c4_i32_12 : i32 to vector<8x1xi32>
    %54 = arith.cmpi slt, %52, %53 : vector<8x1xi32>
    %55 = vector.shape_cast %54 : vector<8x1xi1> to vector<8x1xi1>
    %56 = vector.broadcast %55 : vector<8x1xi1> to vector<8x32xi1>
    %57 = arith.select %56, %49, %50 : vector<8x32xi1>, vector<8x32xf32>
    %58 = arith.mulf %8, %57 : vector<8x32xf32>
    %cst_13 = arith.constant dense<0.000000e+00> : vector<8xf32>
    %59 = vector.multi_reduction <add>, %58, %cst_13 [1] : vector<8x32xf32> to vector<8xf32>
    %60 = vector.shape_cast %59 : vector<8xf32> to vector<8x1xf32>
    %61 = arith.mulf %57, %57 : vector<8x32xf32>
    %cst_14 = arith.constant dense<0.000000e+00> : vector<8xf32>
    %62 = vector.multi_reduction <add>, %61, %cst_14 [1] : vector<8x32xf32> to vector<8xf32>
    %63 = vector.shape_cast %62 : vector<8xf32> to vector<8x1xf32>
    %64 = arith.addf %10, %63 : vector<8x1xf32>
    %cst_15 = arith.constant 2.000000e+00 : f32
    %65 = vector.broadcast %cst_15 : f32 to vector<8x1xf32>
    %66 = arith.mulf %65, %60 : vector<8x1xf32>
    %67 = arith.subf %64, %66 : vector<8x1xf32>
    %68 = arith.maximumf %48, %67 : vector<8x1xf32>
    %c5_i32 = arith.constant 5 : i32
    %69 = tpu.dynamic_rotate %8 by %c5_i32 dim 0 : vector<8x32xf32>, i32 -> vector<8x32xf32>
    %c1_i32_16 = arith.constant 1 : i32
    %70 = tpu.dynamic_rotate %8 by %c1_i32_16 dim 0 : vector<8x32xf32>, i32 -> vector<8x32xf32>
    %c3_i32_17 = arith.constant 3 : i32
    %71 = vector.broadcast %c3_i32_17 : i32 to vector<8x1xi32>
    %72 = arith.addi %27, %71 : vector<8x1xi32>
    %c4_i32_18 = arith.constant 4 : i32
    %73 = vector.broadcast %c4_i32_18 : i32 to vector<8x1xi32>
    %74 = arith.cmpi slt, %72, %73 : vector<8x1xi32>
    %75 = vector.shape_cast %74 : vector<8x1xi1> to vector<8x1xi1>
    %76 = vector.broadcast %75 : vector<8x1xi1> to vector<8x32xi1>
    %77 = arith.select %76, %69, %70 : vector<8x32xi1>, vector<8x32xf32>
    %78 = arith.mulf %8, %77 : vector<8x32xf32>
    %cst_19 = arith.constant dense<0.000000e+00> : vector<8xf32>
    %79 = vector.multi_reduction <add>, %78, %cst_19 [1] : vector<8x32xf32> to vector<8xf32>
    %80 = vector.shape_cast %79 : vector<8xf32> to vector<8x1xf32>
    %81 = arith.mulf %77, %77 : vector<8x32xf32>
    %cst_20 = arith.constant dense<0.000000e+00> : vector<8xf32>
    %82 = vector.multi_reduction <add>, %81, %cst_20 [1] : vector<8x32xf32> to vector<8xf32>
    %83 = vector.shape_cast %82 : vector<8xf32> to vector<8x1xf32>
    %84 = arith.addf %10, %83 : vector<8x1xf32>
    %cst_21 = arith.constant 2.000000e+00 : f32
    %85 = vector.broadcast %cst_21 : f32 to vector<8x1xf32>
    %86 = arith.mulf %85, %80 : vector<8x1xf32>
    %87 = arith.subf %84, %86 : vector<8x1xf32>
    %88 = arith.maximumf %68, %87 : vector<8x1xf32>
    %cst_22 = arith.constant 9.99999996E-13 : f32
    %89 = vector.broadcast %cst_22 : f32 to vector<8x1xf32>
    %90 = arith.maximumf %88, %89 : vector<8x1xf32>
    %91 = math.sqrt %90 : vector<8x1xf32>
    %cst_23 = arith.constant 3.000000e-01 : f32
    %92 = vector.broadcast %cst_23 : f32 to vector<8x1xf32>
    %93 = arith.addf %91, %92 : vector<8x1xf32>
    %cst_24 = arith.constant 0.000000e+00 : f32
    %94 = vector.broadcast %cst_24 : f32 to vector<8x1xf32>
    %95 = arith.maximumf %93, %94 : vector<8x1xf32>
    %c8_i32 = arith.constant 8 : i32
    %96 = arith.muli %arg0, %c8_i32 : i32
    %97 = vector.broadcast %96 : i32 to vector<8x1xi32>
    %98 = arith.addi %97, %11 : vector<8x1xi32>
    %c8_i32_25 = arith.constant 8 : i32
    %99 = vector.broadcast %c8_i32_25 : i32 to vector<8x1xi32>
    %100 = arith.cmpi slt, %98, %99 : vector<8x1xi32>
    %cst_26 = arith.constant 0.000000e+00 : f32
    %101 = vector.broadcast %cst_26 : f32 to vector<8x1xf32>
    %102 = arith.select %100, %95, %101 : vector<8x1xi1>, vector<8x1xf32>
    %103 = vector.shape_cast %102 : vector<8x1xf32> to vector<1x8x1xf32>
    %cst_27 = arith.constant dense<0.000000e+00> : vector<1xf32>
    %104 = vector.multi_reduction <add>, %103, %cst_27 [1, 2] : vector<1x8x1xf32> to vector<1xf32>
    %105 = vector.shape_cast %104 : vector<1xf32> to vector<1x1x1xf32>
    %106 = vector.extract %105[0, 0, 0] : f32 from vector<1x1x1xf32>
    %cst_28 = arith.constant 2.500000e-01 : f32
    %107 = arith.mulf %106, %cst_28 : f32
    %108 = vector.broadcast %107 : f32 to vector<1x1x128xf32>
    %c0_29 = arith.constant 0 : index
    %c0_30 = arith.constant 0 : index
    %c0_31 = arith.constant 0 : index
    %109 = vector.load %arg2[%c0_29, %c0_30, %c0_31] : memref<1x1x128xf32, #tpu.memory_space<vmem>>, vector<1x1x128xf32>
    tpu.vector_store %arg2[%c0_29, %c0_30, %c0_31], %108 {strides = array<i32>} : memref<1x1x128xf32, #tpu.memory_space<vmem>>, vector<1x1x128xf32>,
    return
  }
  func.func @transform_0(%arg0: i32) -> (i32, i32) {
    %c0_i32 = arith.constant 0 : i32
    %c0_i32_0 = arith.constant 0 : i32
    return %arg0, %c0_i32 : i32, i32
  }
  func.func @transform_1(%arg0: i32) -> (i32, i32, i32) {
    %c0_i32 = arith.constant 0 : i32
    %c0_i32_0 = arith.constant 0 : i32
    %c0_i32_1 = arith.constant 0 : i32
    return %arg0, %c0_i32, %c0_i32_0 : i32, i32, i32
  }
}

</mosaic_0001>

<llo_original>
// kernel: tpu_custom_call.1
$region0: #{tpu_custom_call.1}
  #allocation0 [shape = 'u32[]', space=smem, size = 0x4, offset = 0x4, fixed_abs, tag = 'smem constant byte address 0x4 - core index']
  #allocation1 [shape = 'u32[144,128]{1,0:T(1,128)}', space=vmem, size = 0x12000, scoped, tag = 'internal scratch']
  %s0 = inlined_call_operand.hbm [shape: f32[8,32], index: 0, kind: input, shape index: {}]
  %s1 = inlined_call_operand.hbm [shape: f32[1,1,128], index: 1, kind: output, shape index: {}]
  %s2 = sld [smem:[#allocation0]]
  $region18: #{tpu_custom_call.1} parent=0
    _
  %s4 = ssub.s32 1, %s2
  %s5 = scalar_select 0, %s4, %s2
  $region1: #{tpu_custom_call.1} parent=0
    #allocation2 [shape = 'u8[4096]{0}', space=vmem, size = 0x1000, scoped, tag = 'input window, operand 0, single buffered']
    #allocation3 [shape = 's32[1]{0}', space=sflag, size = 0x4, scoped, tag = 'scoped memory for tpu_custom_call.1']
    #allocation4 [shape = 's32[1]{0}', space=sflag, size = 0x4, scoped, tag = 'scoped memory for tpu_custom_call.1']
    #allocation5 [shape = 'u8[512]{0}', space=vmem, size = 0x400, scoped, tag = 'output window, operand 0, single buffered']
    %6 = vsyncpa [#allocation3], 0
    %7 = vsyncpa [#allocation4], 0
    // Predicated region
    $region2: #{tpu_custom_call.1} parent=1 // pred_check
      _
    $region3: #{tpu_custom_call.1} parent=1 // pred_check_branch
      %9 = sbr.rel (0) target = $region5
    $region4: #{tpu_custom_call.1} parent=1 // pred_region
      %s11 = ssub.s32 128, 128
      %12 = vsyncadd [#allocation3], %s11
      %s14 = sshll.u32 [#allocation2], 4
      %s15 = int_to_ptr.vmem [resolvable:$true] %s14
      %17 = dma.hbm_to_vmem [thread:$0]  %s0, 128, %s15, [#allocation3]
    $region5: #{tpu_custom_call.1} parent=1 // pred_fallthru
      _
    // Predicated region
    $region6: #{tpu_custom_call.1} parent=1 // pred_check
      _
    $region7: #{tpu_custom_call.1} parent=1 // pred_check_branch
      %19 = sbr.rel (0) target = $region9
    $region8: #{tpu_custom_call.1} parent=1 // pred_region
      %20 = dma.done [#allocation3], 128
    $region9: #{tpu_custom_call.1} parent=1 // pred_fallthru
      _
    %v21 = vld [vmem:[#allocation2] sm:$0xff]
    %v22 = vmul.f32 %v21, %v21
    %vm23 = vcmask 261120
    %v24 = vsel %vm23, %v22, 0.0
    %25 = vadd.xlane.f32.xlu0 %v24
    %v26 = vpop.xlane.xlu0 %25
    %v27 = vmax.f32 %v26, 1e-24
    %v28 = vrsqrt.pop %v27
    %v29 = vmul.f32 %v21, %v28
    %v30 = vmul.f32 %v26, %v28
    %v31 = vmul.f32 %v30, %v28
    %v32 = vlaneseq
    %v33 = vshrl.u32 %v32, 7
    %vm34 = vcmp.lt.s32.totalorder %v33, 0
    %v35 = vsub.s32 0, %v33
    %v36 = vsel %vm34, %v35, %v33
    %v37 = vshrl.u32 %v36, 2
    %v38 = vand.u32 %v36, 3
    %v39 = vsub.s32 0, %v38
    %v40 = vsel %vm34, %v39, %v38
    %vm41 = vcmp.ne.s32.totalorder %v40, 0
    %vm42 = vcmp.lt.s32.totalorder %v40, 0
    %vm43 = vmand %vm42, %vm41
    %v44 = vadd.s32 %v40, 4
    %v45 = vsel %vm43, %v44, %v40
    %v46 = vrot.slane %v29, 1
    %v47 = vrot.slane %v29, 5
    %v48 = vadd.s32 %v45, 1
    %vm49 = vcmp.lt.s32.totalorder %v48, 4
    %v50 = vsel %vm49, 1, 0
    %vm51 = vcmp.eq.s32.totalorder %v50, 1
    %v52 = vsel %vm51, %v46, %v47
    %v53 = vmul.f32 %v29, %v52
    %v54 = vsel %vm23, %v53, 0.0
    %55 = vadd.xlane.f32.xlu0 %v54
    %v56 = vpop.xlane.xlu0 %55
    %v57 = vmul.f32 %v52, %v52
    %v58 = vsel %vm23, %v57, 0.0
    %59 = vadd.xlane.f32.xlu0 %v58
    %v60 = vpop.xlane.xlu0 %59
    %v61 = vadd.f32 %v31, %v60
    %v62 = vmul.f32 %v56, 2.0
    %v63 = vsub.f32 %v61, %v62
    %v64 = vrot.slane %v29, 2
    %v65 = vrot.slane %v29, 6
    %v66 = vadd.s32 %v45, 2
    %vm67 = vcmp.lt.s32.totalorder %v66, 4
    %v68 = vsel %vm67, 1, 0
    %vm69 = vcmp.eq.s32.totalorder %v68, 1
    %v70 = vsel %vm69, %v64, %v65
    %v71 = vmul.f32 %v29, %v70
    %v72 = vsel %vm23, %v71, 0.0
    %73 = vadd.xlane.f32.xlu0 %v72
    %v74 = vpop.xlane.xlu0 %73
    %v75 = vmul.f32 %v70, %v70
    %v76 = vsel %vm23, %v75, 0.0
    %77 = vadd.xlane.f32.xlu0 %v76
    %v78 = vpop.xlane.xlu0 %77
    %v79 = vadd.f32 %v31, %v78
    %v80 = vmul.f32 %v74, 2.0
    %v81 = vsub.f32 %v79, %v80
    %v82 = vmax.f32 %v63, %v81
    %v83 = vrot.slane %v29, 3
    %v84 = vrot.slane %v29, 7
    %v85 = vadd.s32 %v45, 3
    %vm86 = vcmp.lt.s32.totalorder %v85, 4
    %v87 = vsel %vm86, 1, 0
    %vm88 = vcmp.eq.s32.totalorder %v87, 1
    %v89 = vsel %vm88, %v83, %v84
    %v90 = vmul.f32 %v29, %v89
    %v91 = vsel %vm23, %v90, 0.0
    %92 = vadd.xlane.f32.xlu0 %v91
    %v93 = vpop.xlane.xlu0 %92
    %v94 = vmul.f32 %v89, %v89
    %v95 = vsel %vm23, %v94, 0.0
    %96 = vadd.xlane.f32.xlu0 %v95
    %v97 = vpop.xlane.xlu0 %96
    %v98 = vadd.f32 %v31, %v97
    %v99 = vmul.f32 %v93, 2.0
    %v100 = vsub.f32 %v98, %v99
    %v101 = vmax.f32 %v82, %v100
    %v102 = vmax.f32 %v101, 1e-12
    %v103 = vrsqrt.pop %v102
    %v104 = vmul.f32 %v102, %v103
    %vm105 = vcmp.eq.f32.partialorder %v102, inf
    %v106 = vsel %vm105, %v102, %v104
    %vm107 = vcmp.eq.f32.partialorder %v102, 0.0
    %v108 = vand.u32 %v102, 2147483648
    %v109 = vsel %vm107, %v108, %v106
    %v110 = vadd.f32 %v109, 0.3
    %v111 = vmax.f32 %v110, 0.0
    %s112 = smul.u32 0, 8
    %v113 = vstv %s112
    %v114 = vadd.s32 %v113, %v33
    %vm115 = vcmp.lt.s32.totalorder %v114, 8
    %v116 = vsel %vm115, %v111, 0.0
    %vm117 = vcmask 7168
    %v118 = vsel %vm117, %v116, 0.0
    %119 = vadd.xlane.f32.xlu0 %v118
    %v120 = vpop.xlane.xlu0 %119
    %v121 = vrot.slane %v120, 4
    %v122 = vadd.f32 %v120, %v121
    %v123 = vrot.slane %v122, 2
    %v124 = vadd.f32 %v122, %v123
    %v125 = vrot.slane %v124, 1
    %v126 = vadd.f32 %v124, %v125
    %s127 = vtos %v126
    %s128 = smul.f32 %s127, 0.25
    %v129 = vstv %s128
    %130 = vst [vmem:[#allocation5] sm:$0x1] %v129
    // Predicated region
    $region10: #{tpu_custom_call.1} parent=1 // pred_check
      _
    $region11: #{tpu_custom_call.1} parent=1 // pred_check_branch
      %132 = sbr.rel (0) target = $region13
    $region12: #{tpu_custom_call.1} parent=1 // pred_region
      %s134 = ssub.s32 16, 16
      %135 = vsyncadd [#allocation4], %s134
      %s137 = sshll.u32 [#allocation5], 4
      %s138 = int_to_ptr.vmem [resolvable:$true] %s137
      %140 = dma.vmem_to_hbm [thread:$0]  %s138, 16, %s1, [#allocation4]
    $region13: #{tpu_custom_call.1} parent=1 // pred_fallthru
      _
    // Predicated region
    $region14: #{tpu_custom_call.1} parent=1 // pred_check
      _
    $region15: #{tpu_custom_call.1} parent=1 // pred_check_branch
      %142 = sbr.rel (0) target = $region17
    $region16: #{tpu_custom_call.1} parent=1 // pred_region
      %143 = dma.done [#allocation4], 16
    $region17: #{tpu_custom_call.1} parent=1 // pred_fallthru
      _
    %144 = vsyncpa [#allocation3], 1
    %145 = vsyncpa [#allocation4], 1

</llo_original>
